<compile_context>
chip_gen: v5e
topology: v5e:2x2
jax: 0.10.0
libtpu: 0.0.40
codegen_flags: <defaults>
</compile_context>

<pallas_src>
import functools

import numpy as np
import jax
import jax.numpy as jnp
from jax import lax
from jax.experimental import pallas as pl
from jax.experimental.pallas import tpu as pltpu


NEG = -1e30   # -inf surrogate for the maxpool's implicit padding (f32 math)


def _conv_layer_kernel(pos_ref, xe_ref, xo_ref, wd_ref, bd_ref, wa_ref, ba_ref,
                       *rest, deltas, Ld, Ld_pad, has_sample, mask_pool_tail,
                       mxu_dtype):
    if has_sample:
        ws_ref, bs_ref, o_ref = rest
    else:
        (o_ref,) = rest
    f32 = jnp.float32

    pos = pos_ref[...]                    # [1, N] int32: position inside its Ld_pad segment
    valid = pos < Ld                      # real (non-pad) output positions
    xe = xe_ref[...]                      # [c_in, N]  x at original index 2i   (mxu dtype)
    xo = xo_ref[...]                      # [c_in, N]  x at original index 2i+1 (mxu dtype)

    def seg_shift(a, m, fill):
        """result[:, i] = a[:, i + m] within each Ld_pad segment, `fill` outside."""
        if m == 0:
            return a
        c, n = a.shape
        f = jnp.asarray(fill, a.dtype)
        pad = jnp.full((c, abs(m)), fill, a.dtype)
        if m > 0:
            shifted = jnp.concatenate([a[:, m:], pad], axis=1)
            oob = pos >= (Ld_pad - m)
        else:
            shifted = jnp.concatenate([pad, a[:, :n + m]], axis=1)
            oob = pos < (-m)
        return jnp.where(oob, f, shifted)

    # ---- downConv (stride 2, weight-normed) — per-tap accumulating matmuls -
    # Tap k reads original index 2i + d (d = k*dilation - pad): d even -> even
    # stream shifted by d//2, d odd -> odd stream shifted by d//2.
    h = None
    for k, d in enumerate(deltas):
        tap = seg_shift(xo if (d % 2) else xe, d // 2, 0.0)
        p = jnp.dot(wd_ref[k], tap, preferred_element_type=f32)     # [c_in, N]
        h = p if h is None else h + p
    h = jnp.tanh(h + bd_ref[...].astype(f32))                       # activation1
    h = jnp.where(valid, h, 0.0)          # pad region = actConv's zero padding

    # ---- actConv (k=3, stride 1, pad 1) — per-tap accumulating matmuls -----
    hm = h.astype(mxu_dtype)              # cast ONCE before the 3-tap fan-out
    z = None
    for t in range(3):
        tap = seg_shift(hm, t - 1, 0.0)
        p = jnp.dot(wa_ref[t], tap, preferred_element_type=f32)     # [c_out, N]
        z = p if z is None else z + p
    z = jnp.tanh(z + ba_ref[...].astype(f32))                       # activation2

    # ---- shortcut: optional 1x1 conv, then MaxPool1d(3, 2, pad=1) ----------
    if has_sample:
        ws = ws_ref[...]
        bs = bs_ref[...].astype(f32)
        ye = jnp.dot(ws, xe, preferred_element_type=f32) + bs       # y at 2i
        yo = jnp.dot(ws, xo, preferred_element_type=f32) + bs       # y at 2i+1
    else:
        ye = xe.astype(f32)
        yo = xo.astype(f32)
    t_prev = seg_shift(yo, -1, NEG)       # y[2i-1], -inf at i == 0
    t_next = yo                           # y[2i+1]
    if mask_pool_tail:                    # last odd index 2(Ld-1)+1 lies past the end
        t_next = jnp.where(pos == Ld - 1, jnp.float32(NEG), t_next)
    pooled = jnp.maximum(jnp.maximum(t_prev, ye), t_next)

    o_ref[...] = (z + pooled).astype(o_ref.dtype)                   # residual add


def _conv_layer_forward_impl(x, kparams, *, kernel=3, s=2, dilation=1,
                             mxu_dtype=jnp.bfloat16, bt_max=8):
    """x: [B, L, c_in] -> [B, L_out, c_out]  (same semantics as ConvLayer.forward)."""
    B, L, c_in = x.shape
    wd, bd, wa, ba, ws, bs = kparams      # wd [K,c_in,c_in], wa [3,c_out,c_in], ws [c_out,c_in]
    K = kernel
    assert wd.shape[0] == K
    c_out = wa.shape[1]
    assert s == 2, "kernel is specialised to the module default stride s=2"
    # TODO(synk): s == 1 variant (no pool, stride-1 downConv) not implemented.
    pad_down = (K - 1) * dilation // 2
    Ld = (L + 2 * pad_down - dilation * (K - 1) - 1) // s + 1
    Lp = (L + 2 * 1 - 3) // 2 + 1
    assert Lp == Ld, "conv and pool output lengths must match for the residual add"
    has_sample = (c_in != c_out)
    deltas = tuple(k * dilation - pad_down for k in range(K))
    mask_pool_tail = (2 * (Ld - 1) + 1) >= L

    # Each batch element gets a 128-aligned Ld_pad lane segment -> lane-dense
    # stores, and the stride-2 conv/pool stay cheap static lane shifts.
    Ld_pad = ((Ld + 127) // 128) * 128
    mxu_b = jnp.dtype(mxu_dtype).itemsize
    out_b = jnp.dtype(x.dtype).itemsize

    # Generation-aware VMEM sizing (v7x: 64 MiB/TC, v5e/v6e: 128 MiB).
    try:
        vmem_cap = int(pltpu.get_tpu_info().vmem_capacity_bytes)
    except Exception:
        vmem_cap = 64 * 1024 * 1024
    budget = (vmem_cap * 11) // 20        # ~55% for blocks + temporaries

    def est_bytes(bt_):
        n = bt_ * Ld_pad
        io = 2 * (2 * c_in * mxu_b + c_out * out_b) * n               # double-buffered I/O
        tmp = (2 * c_in * mxu_b + 3 * c_in * 4 + 5 * c_out * 4) * n   # taps/h/z/pool temps
        wgt = (wd.size + wa.size + ws.size) * mxu_b + (c_in + 2 * c_out + n) * 4
        return io + tmp + wgt

    bt = 1
    for cand in range(1, max(1, int(bt_max)) + 1):
        if est_bytes(cand) <= budget:
            bt = cand
    bt = min(bt, B)
    # Keep >= 2 grid steps (v7x has 2 TensorCores) once a half-size block is
    # still comfortably lane-wide.
    if B >= 2 and -(-B // bt) < 2 and (-(-B // 2)) * Ld_pad >= 1024:
        bt = -(-B // 2)
    B_pad = -(-B // bt) * bt              # pad B instead of degrading bt to 1
    nb = B_pad // bt
    vmem_limit = int(min(vmem_cap * 9 // 10, max(2 * est_bytes(bt), 32 * 1024 * 1024)))

    # NCL + even/odd phase split + batch->lane flattening, all in XLA.
    # TODO(synk): expose an NCL (or pre-split) boundary / fuse these transposes
    # into the pallas_call to avoid the extra HBM passes on v5e/v6e.
    x_c = jnp.transpose(x, (2, 0, 1)).astype(mxu_dtype)               # [c_in, B, L]
    x_c = jnp.pad(x_c, ((0, 0), (0, B_pad - B), (0, 2 * Ld_pad - L)))
    x_even = x_c[:, :, 0::2].reshape(c_in, B_pad * Ld_pad)            # original index 2i
    x_odd = x_c[:, :, 1::2].reshape(c_in, B_pad * Ld_pad)             # original index 2i+1
    pos = jnp.tile(jnp.arange(Ld_pad, dtype=jnp.int32), B_pad)[None, :]

    wd_m = wd.astype(mxu_dtype)
    wa_m = wa.astype(mxu_dtype)
    ws_m = ws.astype(mxu_dtype)

    kernel_fn = functools.partial(
        _conv_layer_kernel, deltas=deltas, Ld=Ld, Ld_pad=Ld_pad,
        has_sample=has_sample, mask_pool_tail=mask_pool_tail, mxu_dtype=mxu_dtype)

    n_blk = bt * Ld_pad
    in_arrays = [pos, x_even, x_odd, wd_m, bd, wa_m, ba]
    in_specs = [
        pl.BlockSpec((1, n_blk), lambda g: (0, g)),                   # lane positions
        pl.BlockSpec((c_in, n_blk), lambda g: (0, g)),                # x_even
        pl.BlockSpec((c_in, n_blk), lambda g: (0, g)),                # x_odd
        pl.BlockSpec(wd_m.shape, lambda g: (0, 0, 0)),                # downConv W [K,c_in,c_in]
        pl.BlockSpec(bd.shape, lambda g: (0, 0)),                     # downConv b [c_in,1]
        pl.BlockSpec(wa_m.shape, lambda g: (0, 0, 0)),                # actConv  W [3,c_out,c_in]
        pl.BlockSpec(ba.shape, lambda g: (0, 0)),                     # actConv  b [c_out,1]
    ]
    if has_sample:
        in_arrays += [ws_m, bs]
        in_specs += [pl.BlockSpec(ws_m.shape, lambda g: (0, 0)),      # sampleConv W [c_out,c_in]
                     pl.BlockSpec(bs.shape, lambda g: (0, 0))]        # sampleConv b [c_out,1]

    out_flat = pl.pallas_call(
        kernel_fn,
        out_shape=jax.ShapeDtypeStruct((c_out, B_pad * Ld_pad), x.dtype),
        grid_spec=pltpu.PrefetchScalarGridSpec(
            num_scalar_prefetch=0,
            grid=(nb,),
            in_specs=in_specs,
            out_specs=pl.BlockSpec((c_out, n_blk), lambda g: (0, g)),
        ),
        compiler_params=pltpu.CompilerParams(
            dimension_semantics=("parallel",),
            vmem_limit_bytes=vmem_limit),
    )(*in_arrays)
    # TODO(synk): for very long sequences add an Ld grid axis with a ±1-column
    # halo instead of relying on bt alone to bound the block size.

    out = out_flat.reshape(c_out, B_pad, Ld_pad)[:, :B, :Ld]
    return jnp.transpose(out, (1, 2, 0))                              # [B, Ld, c_out]


conv_layer_forward = jax.jit(
    _conv_layer_forward_impl,
    static_argnames=("kernel", "s", "dilation", "mxu_dtype", "bt_max"))


def init_params(key, c_in, c_out, kernel=3):
    """Deterministic parameter init, PyTorch (O, I, K) layout, weight_norm applied."""
    ks = jax.random.split(key, 8)
    v_down = 0.3 * jax.random.normal(ks[0], (c_in, c_in, kernel), jnp.float32)
    g_down = 1.0 + 0.1 * jax.random.normal(ks[1], (c_in, 1, 1), jnp.float32)
    w_down = g_down * v_down / jnp.sqrt(jnp.sum(v_down ** 2, axis=(1, 2), keepdims=True))
    b_down = 0.1 * jax.random.normal(ks[2], (c_in,), jnp.float32)
    v_act = 0.3 * jax.random.normal(ks[3], (c_out, c_in, 3), jnp.float32)
    g_act = 1.0 + 0.1 * jax.random.normal(ks[4], (c_out, 1, 1), jnp.float32)
    w_act = g_act * v_act / jnp.sqrt(jnp.sum(v_act ** 2, axis=(1, 2), keepdims=True))
    b_act = 0.1 * jax.random.normal(ks[5], (c_out,), jnp.float32)
    w_samp = 0.3 * jax.random.normal(ks[6], (c_out, c_in, 1), jnp.float32)
    b_samp = 0.1 * jax.random.normal(ks[7], (c_out,), jnp.float32)
    return w_down, b_down, w_act, b_act, w_samp, b_samp


def to_kernel_layout(pt_params):
    """PyTorch (O, I, K) conv weights -> tap-major [K, O, I]; biases -> [C, 1]."""
    w_down, b_down, w_act, b_act, w_samp, b_samp = pt_params
    wd = jnp.transpose(w_down, (2, 0, 1))          # [K, c_in, c_in], wd[k] = W[:, :, k]
    wa = jnp.transpose(w_act, (2, 0, 1))           # [3, c_out, c_in]
    ws = w_samp[:, :, 0]                           # [c_out, c_in]
    return (wd, b_down[:, None], wa, b_act[:, None], ws, b_samp[:, None])


def reference_forward(x, pt_params, *, kernel=3, s=2, dilation=1):
    """Pure-JAX reference mirroring the PyTorch forward (for verification)."""
    w_down, b_down, w_act, b_act, w_samp, b_samp = pt_params
    c_in = w_down.shape[0]
    c_out = w_act.shape[0]
    pad_down = (kernel - 1) * dilation // 2
    xc = jnp.transpose(x, (0, 2, 1))               # [B, C, L]

    def conv1d(inp, w, b, stride, padding, dil=1):
        out = lax.conv_general_dilated(
            inp, w, window_strides=(stride,), padding=[(padding, padding)],
            rhs_dilation=(dil,), dimension_numbers=("NCH", "OIH", "NCH"),
            precision=lax.Precision.HIGHEST)
        return out + b[None, :, None]

    y = conv1d(xc, w_samp, b_samp, 1, 0) if c_in != c_out else xc      # sampleConv / identity
    y = lax.reduce_window(y, -jnp.inf, lax.max,                        # MaxPool1d(3, 2, pad=1)
                          (1, 1, 3), (1, 1, 2), [(0, 0), (0, 0), (1, 1)])
    h = jnp.tanh(conv1d(xc, w_down, b_down, s, pad_down, dilation))
    z = jnp.tanh(conv1d(h, w_act, b_act, 1, 1))
    return jnp.transpose(z + y, (0, 2, 1))                             # [B, L_out, c_out]


if __name__ == "__main__":
    key = jax.random.PRNGKey(0)
    k_x, k_p, k_x2, k_p2 = jax.random.split(key, 4)

    # Case 1: c_in != c_out (sampleConv shortcut), even L.
    B, L, C_IN, C_OUT = 2, 16, 4, 8
    x = jax.random.normal(k_x, (B, L, C_IN), jnp.float32)
    pt_params = init_params(k_p, C_IN, C_OUT, kernel=3)
    kparams = to_kernel_layout(pt_params)
    ref = jax.block_until_ready(reference_forward(x, pt_params))

    # Exact-arithmetic path (f32 MXU operands): tight check.
    out_f32 = jax.block_until_ready(
        conv_layer_forward(x, kparams, mxu_dtype=jnp.float32))
    assert out_f32.shape == (B, (L - 1) // 2 + 1, C_OUT), out_f32.shape
    np.testing.assert_allclose(np.asarray(out_f32), np.asarray(ref), rtol=1e-3, atol=1e-3)

    # Production path (bf16 MXU operands + bf16 I/O, f32 accumulation): loose check.
    out_bf16 = jax.block_until_ready(
        conv_layer_forward(x, kparams, mxu_dtype=jnp.bfloat16))
    np.testing.assert_allclose(np.asarray(out_bf16), np.asarray(ref), rtol=5e-2, atol=5e-2)

    # Case 2: c_in == c_out (identity shortcut) and odd L (pool-tail mask path).
    B2, L2, C2 = 2, 15, 8
    x2 = jax.random.normal(k_x2, (B2, L2, C2), jnp.float32)
    pt2 = init_params(k_p2, C2, C2, kernel=3)
    kp2 = to_kernel_layout(pt2)
    ref2 = jax.block_until_ready(reference_forward(x2, pt2))
    out2 = jax.block_until_ready(
        conv_layer_forward(x2, kp2, mxu_dtype=jnp.float32))
    np.testing.assert_allclose(np.asarray(out2), np.asarray(ref2), rtol=1e-3, atol=1e-3)

    print("KERNEL_OK")
</pallas_src>

<mosaic_0001>
module attributes {stable_mosaic.version = 11 : i64} {
  func.func @_conv_layer_kernel(%arg0: i32, %arg1: memref<1x256xi32, #tpu.memory_space<vmem>>, %arg2: memref<4x256xf32, #tpu.memory_space<vmem>>, %arg3: memref<4x256xf32, #tpu.memory_space<vmem>>, %arg4: memref<3x4x4xf32, #tpu.memory_space<vmem>>, %arg5: memref<4x1xf32, #tpu.memory_space<vmem>>, %arg6: memref<3x8x4xf32, #tpu.memory_space<vmem>>, %arg7: memref<8x1xf32, #tpu.memory_space<vmem>>, %arg8: memref<8x4xf32, #tpu.memory_space<vmem>>, %arg9: memref<8x1xf32, #tpu.memory_space<vmem>>, %arg10: memref<8x256xf32, #tpu.memory_space<vmem>>) attributes {dimension_semantics = [#tpu.dimension_semantics<parallel>], iteration_bounds = array<i64: 1>, scalar_prefetch = 0 : i64, scratch_operands = 0 : i64, tpu.core_type = #tpu.core_type<tc>, window_params = [{transform_indices = @transform_0, window_bounds = array<i64: 1, 256>}, {transform_indices = @transform_1, window_bounds = array<i64: 4, 256>}, {transform_indices = @transform_2, window_bounds = array<i64: 4, 256>}, {pipeline_mode = #tpu.pipeline_mode<synchronous>, transform_indices = @transform_3, window_bounds = array<i64: 3, 4, 4>}, {pipeline_mode = #tpu.pipeline_mode<synchronous>, transform_indices = @transform_4, window_bounds = array<i64: 4, 1>}, {pipeline_mode = #tpu.pipeline_mode<synchronous>, transform_indices = @transform_5, window_bounds = array<i64: 3, 8, 4>}, {pipeline_mode = #tpu.pipeline_mode<synchronous>, transform_indices = @transform_6, window_bounds = array<i64: 8, 1>}, {pipeline_mode = #tpu.pipeline_mode<synchronous>, transform_indices = @transform_7, window_bounds = array<i64: 8, 4>}, {pipeline_mode = #tpu.pipeline_mode<synchronous>, transform_indices = @transform_8, window_bounds = array<i64: 8, 1>}, {transform_indices = @transform_9, window_bounds = array<i64: 8, 256>}]} {
    %c0 = arith.constant 0 : index
    %c0_0 = arith.constant 0 : index
    %0 = vector.load %arg1[%c0, %c0_0] : memref<1x256xi32, #tpu.memory_space<vmem>>, vector<1x256xi32>
    %c8_i32 = arith.constant 8 : i32
    %1 = vector.broadcast %c8_i32 : i32 to vector<1x256xi32>
    %2 = arith.cmpi slt, %0, %1 : vector<1x256xi32>
    %c0_1 = arith.constant 0 : index
    %c0_2 = arith.constant 0 : index
    %3 = vector.load %arg2[%c0_1, %c0_2] : memref<4x256xf32, #tpu.memory_space<vmem>>, vector<4x256xf32>
    %c0_3 = arith.constant 0 : index
    %c0_4 = arith.constant 0 : index
    %4 = vector.load %arg3[%c0_3, %c0_4] : memref<4x256xf32, #tpu.memory_space<vmem>>, vector<4x256xf32>
    %cst = arith.constant 0.000000e+00 : f32
    %5 = vector.broadcast %cst : f32 to vector<4x1xf32>
    %6 = vector.extract_strided_slice %4 {offsets = [0, 0], sizes = [4, 255], strides = [1, 1]} : vector<4x256xf32> to vector<4x255xf32>
    %7 = tpu.concatenate %5, %6 in 1 : vector<4x1xf32>, vector<4x255xf32> -> vector<4x256xf32>
    %c1_i32 = arith.constant 1 : i32
    %8 = vector.broadcast %c1_i32 : i32 to vector<1x256xi32>
    %9 = arith.cmpi slt, %0, %8 : vector<1x256xi32>
    %cst_5 = arith.constant 0.000000e+00 : f32
    %10 = vector.shape_cast %9 : vector<1x256xi1> to vector<1x256xi1>
    %11 = vector.broadcast %10 : vector<1x256xi1> to vector<4x256xi1>
    %12 = vector.broadcast %cst_5 : f32 to vector<4x256xf32>
    %13 = arith.select %11, %12, %7 : vector<4x256xi1>, vector<4x256xf32>
    %c0_6 = arith.constant 0 : index
    %c0_7 = arith.constant 0 : index
    %c0_8 = arith.constant 0 : index
    %14 = vector.load %arg4[%c0_6, %c0_7, %c0_8] : memref<3x4x4xf32, #tpu.memory_space<vmem>>, vector<1x4x4xf32>
    %15 = vector.shape_cast %14 : vector<1x4x4xf32> to vector<4x4xf32>
    %cst_9 = arith.constant dense<0.000000e+00> : vector<4x256xf32>
    %16 = tpu.matmul %15, %13, %cst_9 {dimension_numbers = #tpu.dot_dimension_numbers<[1], [0], [0], [1], [0, 0, 1, 1], [], []>} : vector<4x4xf32>, vector<4x256xf32>, vector<4x256xf32> -> vector<4x256xf32>
    %c1 = arith.constant 1 : index
    %c0_10 = arith.constant 0 : index
    %c0_11 = arith.constant 0 : index
    %17 = vector.load %arg4[%c1, %c0_10, %c0_11] : memref<3x4x4xf32, #tpu.memory_space<vmem>>, vector<1x4x4xf32>
    %18 = vector.shape_cast %17 : vector<1x4x4xf32> to vector<4x4xf32>
    %cst_12 = arith.constant dense<0.000000e+00> : vector<4x256xf32>
    %19 = tpu.matmul %18, %3, %cst_12 {dimension_numbers = #tpu.dot_dimension_numbers<[1], [0], [0], [1], [0, 0, 1, 1], [], []>} : vector<4x4xf32>, vector<4x256xf32>, vector<4x256xf32> -> vector<4x256xf32>
    %20 = arith.addf %16, %19 : vector<4x256xf32>
    %c2 = arith.constant 2 : index
    %c0_13 = arith.constant 0 : index
    %c0_14 = arith.constant 0 : index
    %21 = vector.load %arg4[%c2, %c0_13, %c0_14] : memref<3x4x4xf32, #tpu.memory_space<vmem>>, vector<1x4x4xf32>
    %22 = vector.shape_cast %21 : vector<1x4x4xf32> to vector<4x4xf32>
    %cst_15 = arith.constant dense<0.000000e+00> : vector<4x256xf32>
    %23 = tpu.matmul %22, %4, %cst_15 {dimension_numbers = #tpu.dot_dimension_numbers<[1], [0], [0], [1], [0, 0, 1, 1], [], []>} : vector<4x4xf32>, vector<4x256xf32>, vector<4x256xf32> -> vector<4x256xf32>
    %24 = arith.addf %20, %23 : vector<4x256xf32>
    %c0_16 = arith.constant 0 : index
    %c0_17 = arith.constant 0 : index
    %25 = vector.load %arg5[%c0_16, %c0_17] : memref<4x1xf32, #tpu.memory_space<vmem>>, vector<4x1xf32>
    %26 = vector.broadcast %25 : vector<4x1xf32> to vector<4x256xf32>
    %27 = arith.addf %24, %26 : vector<4x256xf32>
    %28 = math.tanh %27 : vector<4x256xf32>
    %cst_18 = arith.constant 0.000000e+00 : f32
    %29 = vector.shape_cast %2 : vector<1x256xi1> to vector<1x256xi1>
    %30 = vector.broadcast %29 : vector<1x256xi1> to vector<4x256xi1>
    %31 = vector.broadcast %cst_18 : f32 to vector<4x256xf32>
    %32 = arith.select %30, %28, %31 : vector<4x256xi1>, vector<4x256xf32>
    %cst_19 = arith.constant 0.000000e+00 : f32
    %33 = vector.broadcast %cst_19 : f32 to vector<4x1xf32>
    %34 = vector.extract_strided_slice %32 {offsets = [0, 0], sizes = [4, 255], strides = [1, 1]} : vector<4x256xf32> to vector<4x255xf32>
    %35 = tpu.concatenate %33, %34 in 1 : vector<4x1xf32>, vector<4x255xf32> -> vector<4x256xf32>
    %c1_i32_20 = arith.constant 1 : i32
    %36 = vector.broadcast %c1_i32_20 : i32 to vector<1x256xi32>
    %37 = arith.cmpi slt, %0, %36 : vector<1x256xi32>
    %cst_21 = arith.constant 0.000000e+00 : f32
    %38 = vector.shape_cast %37 : vector<1x256xi1> to vector<1x256xi1>
    %39 = vector.broadcast %38 : vector<1x256xi1> to vector<4x256xi1>
    %40 = vector.broadcast %cst_21 : f32 to vector<4x256xf32>
    %41 = arith.select %39, %40, %35 : vector<4x256xi1>, vector<4x256xf32>
    %c0_22 = arith.constant 0 : index
    %c0_23 = arith.constant 0 : index
    %c0_24 = arith.constant 0 : index
    %42 = vector.load %arg6[%c0_22, %c0_23, %c0_24] : memref<3x8x4xf32, #tpu.memory_space<vmem>>, vector<1x8x4xf32>
    %43 = vector.shape_cast %42 : vector<1x8x4xf32> to vector<8x4xf32>
    %cst_25 = arith.constant dense<0.000000e+00> : vector<8x256xf32>
    %44 = tpu.matmul %43, %41, %cst_25 {dimension_numbers = #tpu.dot_dimension_numbers<[1], [0], [0], [1], [0, 0, 1, 1], [], []>} : vector<8x4xf32>, vector<4x256xf32>, vector<8x256xf32> -> vector<8x256xf32>
    %c1_26 = arith.constant 1 : index
    %c0_27 = arith.constant 0 : index
    %c0_28 = arith.constant 0 : index
    %45 = vector.load %arg6[%c1_26, %c0_27, %c0_28] : memref<3x8x4xf32, #tpu.memory_space<vmem>>, vector<1x8x4xf32>
    %46 = vector.shape_cast %45 : vector<1x8x4xf32> to vector<8x4xf32>
    %cst_29 = arith.constant dense<0.000000e+00> : vector<8x256xf32>
    %47 = tpu.matmul %46, %32, %cst_29 {dimension_numbers = #tpu.dot_dimension_numbers<[1], [0], [0], [1], [0, 0, 1, 1], [], []>} : vector<8x4xf32>, vector<4x256xf32>, vector<8x256xf32> -> vector<8x256xf32>
    %48 = arith.addf %44, %47 : vector<8x256xf32>
    %cst_30 = arith.constant 0.000000e+00 : f32
    %49 = vector.broadcast %cst_30 : f32 to vector<4x1xf32>
    %50 = vector.extract_strided_slice %32 {offsets = [0, 1], sizes = [4, 255], strides = [1, 1]} : vector<4x256xf32> to vector<4x255xf32>
    %51 = tpu.concatenate %50, %49 in 1 : vector<4x255xf32>, vector<4x1xf32> -> vector<4x256xf32>
    %c127_i32 = arith.constant 127 : i32
    %52 = vector.broadcast %c127_i32 : i32 to vector<1x256xi32>
    %53 = arith.cmpi sge, %0, %52 : vector<1x256xi32>
    %cst_31 = arith.constant 0.000000e+00 : f32
    %54 = vector.shape_cast %53 : vector<1x256xi1> to vector<1x256xi1>
    %55 = vector.broadcast %54 : vector<1x256xi1> to vector<4x256xi1>
    %56 = vector.broadcast %cst_31 : f32 to vector<4x256xf32>
    %57 = arith.select %55, %56, %51 : vector<4x256xi1>, vector<4x256xf32>
    %c2_32 = arith.constant 2 : index
    %c0_33 = arith.constant 0 : index
    %c0_34 = arith.constant 0 : index
    %58 = vector.load %arg6[%c2_32, %c0_33, %c0_34] : memref<3x8x4xf32, #tpu.memory_space<vmem>>, vector<1x8x4xf32>
    %59 = vector.shape_cast %58 : vector<1x8x4xf32> to vector<8x4xf32>
    %cst_35 = arith.constant dense<0.000000e+00> : vector<8x256xf32>
    %60 = tpu.matmul %59, %57, %cst_35 {dimension_numbers = #tpu.dot_dimension_numbers<[1], [0], [0], [1], [0, 0, 1, 1], [], []>} : vector<8x4xf32>, vector<4x256xf32>, vector<8x256xf32> -> vector<8x256xf32>
    %61 = arith.addf %48, %60 : vector<8x256xf32>
    %c0_36 = arith.constant 0 : index
    %c0_37 = arith.constant 0 : index
    %62 = vector.load %arg7[%c0_36, %c0_37] : memref<8x1xf32, #tpu.memory_space<vmem>>, vector<8x1xf32>
    %63 = vector.broadcast %62 : vector<8x1xf32> to vector<8x256xf32>
    %64 = arith.addf %61, %63 : vector<8x256xf32>
    %65 = math.tanh %64 : vector<8x256xf32>
    %c0_38 = arith.constant 0 : index
    %c0_39 = arith.constant 0 : index
    %66 = vector.load %arg8[%c0_38, %c0_39] : memref<8x4xf32, #tpu.memory_space<vmem>>, vector<8x4xf32>
    %c0_40 = arith.constant 0 : index
    %c0_41 = arith.constant 0 : index
    %67 = vector.load %arg9[%c0_40, %c0_41] : memref<8x1xf32, #tpu.memory_space<vmem>>, vector<8x1xf32>
    %cst_42 = arith.constant dense<0.000000e+00> : vector<8x256xf32>
    %68 = tpu.matmul %66, %3, %cst_42 {dimension_numbers = #tpu.dot_dimension_numbers<[1], [0], [0], [1], [0, 0, 1, 1], [], []>} : vector<8x4xf32>, vector<4x256xf32>, vector<8x256xf32> -> vector<8x256xf32>
    %69 = vector.broadcast %67 : vector<8x1xf32> to vector<8x256xf32>
    %70 = arith.addf %68, %69 : vector<8x256xf32>
    %cst_43 = arith.constant dense<0.000000e+00> : vector<8x256xf32>
    %71 = tpu.matmul %66, %4, %cst_43 {dimension_numbers = #tpu.dot_dimension_numbers<[1], [0], [0], [1], [0, 0, 1, 1], [], []>} : vector<8x4xf32>, vector<4x256xf32>, vector<8x256xf32> -> vector<8x256xf32>
    %72 = vector.broadcast %67 : vector<8x1xf32> to vector<8x256xf32>
    %73 = arith.addf %71, %72 : vector<8x256xf32>
    %cst_44 = arith.constant -1.000000e+30 : f32
    %74 = vector.broadcast %cst_44 : f32 to vector<8x1xf32>
    %75 = vector.extract_strided_slice %73 {offsets = [0, 0], sizes = [8, 255], strides = [1, 1]} : vector<8x256xf32> to vector<8x255xf32>
    %76 = tpu.concatenate %74, %75 in 1 : vector<8x1xf32>, vector<8x255xf32> -> vector<8x256xf32>
    %c1_i32_45 = arith.constant 1 : i32
    %77 = vector.broadcast %c1_i32_45 : i32 to vector<1x256xi32>
    %78 = arith.cmpi slt, %0, %77 : vector<1x256xi32>
    %cst_46 = arith.constant -1.000000e+30 : f32
    %79 = vector.shape_cast %78 : vector<1x256xi1> to vector<1x256xi1>
    %80 = vector.broadcast %79 : vector<1x256xi1> to vector<8x256xi1>
    %81 = vector.broadcast %cst_46 : f32 to vector<8x256xf32>
    %82 = arith.select %80, %81, %76 : vector<8x256xi1>, vector<8x256xf32>
    %83 = arith.maximumf %82, %70 : vector<8x256xf32>
    %84 = arith.maximumf %83, %73 : vector<8x256xf32>
    %85 = arith.addf %65, %84 : vector<8x256xf32>
    %c0_47 = arith.constant 0 : index
    %c0_48 = arith.constant 0 : index
    %86 = vector.load %arg10[%c0_47, %c0_48] : memref<8x256xf32, #tpu.memory_space<vmem>>, vector<8x256xf32>
    tpu.vector_store %arg10[%c0_47, %c0_48], %85 {strides = array<i32>} : memref<8x256xf32, #tpu.memory_space<vmem>>, vector<8x256xf32>,
    return
  }
  func.func @transform_0(%arg0: i32) -> (i32, i32) {
    %c0_i32 = arith.constant 0 : i32
    %c0_i32_0 = arith.constant 0 : i32
    return %c0_i32, %arg0 : i32, i32
  }
  func.func @transform_1(%arg0: i32) -> (i32, i32) {
    %c0_i32 = arith.constant 0 : i32
    %c0_i32_0 = arith.constant 0 : i32
    return %c0_i32, %arg0 : i32, i32
  }
  func.func @transform_2(%arg0: i32) -> (i32, i32) {
    %c0_i32 = arith.constant 0 : i32
    %c0_i32_0 = arith.constant 0 : i32
    return %c0_i32, %arg0 : i32, i32
  }
  func.func @transform_3(%arg0: i32) -> (i32, i32, i32) {
    %c0_i32 = arith.constant 0 : i32
    %c0_i32_0 = arith.constant 0 : i32
    %c0_i32_1 = arith.constant 0 : i32
    %c0_i32_2 = arith.constant 0 : i32
    return %c0_i32, %c0_i32_0, %c0_i32_1 : i32, i32, i32
  }
  func.func @transform_4(%arg0: i32) -> (i32, i32) {
    %c0_i32 = arith.constant 0 : i32
    %c0_i32_0 = arith.constant 0 : i32
    %c0_i32_1 = arith.constant 0 : i32
    return %c0_i32, %c0_i32_0 : i32, i32
  }
  func.func @transform_5(%arg0: i32) -> (i32, i32, i32) {
    %c0_i32 = arith.constant 0 : i32
    %c0_i32_0 = arith.constant 0 : i32
    %c0_i32_1 = arith.constant 0 : i32
    %c0_i32_2 = arith.constant 0 : i32
    return %c0_i32, %c0_i32_0, %c0_i32_1 : i32, i32, i32
  }
  func.func @transform_6(%arg0: i32) -> (i32, i32) {
    %c0_i32 = arith.constant 0 : i32
    %c0_i32_0 = arith.constant 0 : i32
    %c0_i32_1 = arith.constant 0 : i32
    return %c0_i32, %c0_i32_0 : i32, i32
  }
  func.func @transform_7(%arg0: i32) -> (i32, i32) {
    %c0_i32 = arith.constant 0 : i32
    %c0_i32_0 = arith.constant 0 : i32
    %c0_i32_1 = arith.constant 0 : i32
    return %c0_i32, %c0_i32_0 : i32, i32
  }
  func.func @transform_8(%arg0: i32) -> (i32, i32) {
    %c0_i32 = arith.constant 0 : i32
    %c0_i32_0 = arith.constant 0 : i32
    %c0_i32_1 = arith.constant 0 : i32
    return %c0_i32, %c0_i32_0 : i32, i32
  }
  func.func @transform_9(%arg0: i32) -> (i32, i32) {
    %c0_i32 = arith.constant 0 : i32
    %c0_i32_0 = arith.constant 0 : i32
    return %c0_i32, %arg0 : i32, i32
  }
}

</mosaic_0001>

<llo_original>
// kernel: _conv_layer_forward_impl.1
$region0: #{_conv_layer_forward_impl.1}
  #allocation0 [shape = 'u32[]', space=smem, size = 0x4, offset = 0x4, fixed_abs, tag = 'smem constant byte address 0x4 - core index']
  #allocation1 [shape = 'u32[72,128]{1,0:T(1,128)}', space=vmem, size = 0x9000, scoped, tag = 'internal scratch']
  %s0 = inlined_call_operand.vmem [shape: s32[1,256], index: 0, kind: input, shape index: {}]
  %s1 = inlined_call_operand.vmem [shape: f32[4,256], index: 1, kind: input, shape index: {}]
  %s2 = inlined_call_operand.vmem [shape: f32[4,256], index: 2, kind: input, shape index: {}]
  %s3 = inlined_call_operand.vmem [shape: f32[3,4,4], index: 3, kind: input, shape index: {}]
  %s4 = inlined_call_operand.vmem [shape: f32[4,1], index: 4, kind: input, shape index: {}]
  %s5 = inlined_call_operand.vmem [shape: f32[3,8,4], index: 5, kind: input, shape index: {}]
  %s6 = inlined_call_operand.vmem [shape: f32[8,1], index: 6, kind: input, shape index: {}]
  %s7 = inlined_call_operand.vmem [shape: f32[8,4], index: 7, kind: input, shape index: {}]
  %s8 = inlined_call_operand.vmem [shape: f32[8,1], index: 8, kind: input, shape index: {}]
  %s9 = inlined_call_operand.vmem [shape: f32[8,256], index: 9, kind: output, shape index: {}]
  %s10 = sld [smem:[#allocation0]]
  $region46: #{_conv_layer_forward_impl.1} parent=0
    _
  %s12 = ssub.s32 1, %s10
  %s13 = scalar_select 0, %s12, %s10
  // Predicated region
  $region2: #{_conv_layer_forward_impl.1} parent=0 // pred_check
    _
  $region3: #{_conv_layer_forward_impl.1} parent=0 // pred_check_branch
    %15 = sbr.rel (0) target = $region5
  $region4: #{_conv_layer_forward_impl.1} parent=0 // pred_region
    _
  $region5: #{_conv_layer_forward_impl.1} parent=0 // pred_fallthru
    _
  // Predicated region
  $region6: #{_conv_layer_forward_impl.1} parent=0 // pred_check
    _
  $region7: #{_conv_layer_forward_impl.1} parent=0 // pred_check_branch
    %17 = sbr.rel (0) target = $region9
  $region8: #{_conv_layer_forward_impl.1} parent=0 // pred_region
    _
  $region9: #{_conv_layer_forward_impl.1} parent=0 // pred_fallthru
    _
  // Predicated region
  $region10: #{_conv_layer_forward_impl.1} parent=0 // pred_check
    _
  $region11: #{_conv_layer_forward_impl.1} parent=0 // pred_check_branch
    %19 = sbr.rel (0) target = $region13
  $region12: #{_conv_layer_forward_impl.1} parent=0 // pred_region
    _
  $region13: #{_conv_layer_forward_impl.1} parent=0 // pred_fallthru
    _
  // Predicated region
  $region14: #{_conv_layer_forward_impl.1} parent=0 // pred_check
    _
  $region15: #{_conv_layer_forward_impl.1} parent=0 // pred_check_branch
    %21 = sbr.rel (0) target = $region17
  $region16: #{_conv_layer_forward_impl.1} parent=0 // pred_region
    _
  $region17: #{_conv_layer_forward_impl.1} parent=0 // pred_fallthru
    _
  // Predicated region
  $region18: #{_conv_layer_forward_impl.1} parent=0 // pred_check
    _
  $region19: #{_conv_layer_forward_impl.1} parent=0 // pred_check_branch
    %23 = sbr.rel (0) target = $region21
  $region20: #{_conv_layer_forward_impl.1} parent=0 // pred_region
    _
  $region21: #{_conv_layer_forward_impl.1} parent=0 // pred_fallthru
    _
  // Predicated region
  $region22: #{_conv_layer_forward_impl.1} parent=0 // pred_check
    _
  $region23: #{_conv_layer_forward_impl.1} parent=0 // pred_check_branch
    %25 = sbr.rel (0) target = $region25
  $region24: #{_conv_layer_forward_impl.1} parent=0 // pred_region
    _
  $region25: #{_conv_layer_forward_impl.1} parent=0 // pred_fallthru
    _
  // Predicated region
  $region26: #{_conv_layer_forward_impl.1} parent=0 // pred_check
    _
  $region27: #{_conv_layer_forward_impl.1} parent=0 // pred_check_branch
    %27 = sbr.rel (0) target = $region29
  $region28: #{_conv_layer_forward_impl.1} parent=0 // pred_region
    _
  $region29: #{_conv_layer_forward_impl.1} parent=0 // pred_fallthru
    _
  // Predicated region
  $region30: #{_conv_layer_forward_impl.1} parent=0 // pred_check
    _
  $region31: #{_conv_layer_forward_impl.1} parent=0 // pred_check_branch
    %29 = sbr.rel (0) target = $region33
  $region32: #{_conv_layer_forward_impl.1} parent=0 // pred_region
    _
  $region33: #{_conv_layer_forward_impl.1} parent=0 // pred_fallthru
    _
  // Predicated region
  $region34: #{_conv_layer_forward_impl.1} parent=0 // pred_check
    _
  $region35: #{_conv_layer_forward_impl.1} parent=0 // pred_check_branch
    %31 = sbr.rel (0) target = $region37
  $region36: #{_conv_layer_forward_impl.1} parent=0 // pred_region
    _
  $region37: #{_conv_layer_forward_impl.1} parent=0 // pred_fallthru
    _
  %v32 = vld [vmem:[%s0] sm:$0x3]
  %vm33 = vcmp.lt.s32.totalorder %v32, 8
  %v34 = vld [vmem:[%s1] sm:$0xff]
  %v35 = vld [vmem:[%s2] sm:$0xff]
  %37 = vst [vmem:[#allocation1] ss:$2 sm:$0xff] %v35
  %v38 = vld.sshfl [vmem:[#allocation1] sm:$0xff pattern:$0x75316420]
  %v39 = vld.sshfl [vmem:[#allocation1 + $0x8] sm:$0xff pattern:$0x75316420]
  %40 = vrot.lane.b32.xlu0 %v38, 1
  %v41 = vpop.permute.xlu0 %40
  %42 = vrot.lane.b32.xlu0 %v39, 1
  %v43 = vpop.permute.xlu0 %42
  %vm44 = vcmask 7168
  %v45 = vsel %vm44, %v41, %v43
  %v48 = vsel %vm44, 0.0, %v41
  %vm49 = vcmp.lt.s32.totalorder %v32, 1
  %v50 = vsel %vm49, 1, 0
  %v51 = vperm.slane %v50, 0
  %v52 = vperm.slane %v50, 1
  %vm53 = vcmp.eq.s32.totalorder %v51, 1
  %vm54 = vcmp.eq.s32.totalorder %v52, 1
  %v55 = vsel %vm53, 0.0, %v48
  %v56 = vsel %vm54, 0.0, %v45
  %v57 = vld [vmem:[%s3] sm:$0xf]
  %s58 = scalar_lea.vmem %s3, 4
  %v59 = vld [vmem:[%s58] sm:$0xf]
  %61 = vst [vmem:[#allocation1] ss:$2 sm:$0xff] %v34
  %v62 = vld.sshfl [vmem:[#allocation1] sm:$0xff pattern:$0x75316420]
  %v63 = vld.sshfl [vmem:[#allocation1 + $0x8] sm:$0xff pattern:$0x75316420]
  %vm64 = vcmask 31744
  %v66 = vsel %vm64, %v59, 0
  %vm68 = vcmask 1043456
  %v69 = vsel %vm68, %v62, 0
  %v71 = vsel %vm68, %v63, 0
  %73 = vmatpush.msra.mxu0 0.0
  %74 = vmatpush.msra.mxu0 0.0
  %75 = vmatpush.msra.mxu0 0.0
  %76 = vmatpush.msra.mxu0 0.0
  %77 = vmatpush.msra.mxu0 0.0
  %78 = vmatpush.msra.mxu0 0.0
  %79 = vmatpush.msra.mxu0 0.0
  %80 = vmatpush.msra.mxu0 0.0
  %81 = vmatpush.msra.mxu0 0.0
  %82 = vmatpush.msra.mxu0 0.0
  %83 = vmatpush.msra.mxu0 0.0
  %84 = vmatpush.msra.mxu0 0.0
  %85 = vmatpush.msra.mxu0 0.0
  %86 = vmatpush.msra.mxu0 0.0
  %87 = vmatpush.msra.mxu0 0.0
  %88 = vmatpush.msra.mxu0 %v69
  %89 = vmatmul.f32.gmra.mxu0 %v66
  %v90 = vpop.f32.mrf.mxu0
  %v91 = vadd.f32 0.0, %v90
  %92 = vdwg.mxu0
  %93 = vmatpush.msra.mxu0 0.0
  %94 = vmatpush.msra.mxu0 0.0
  %95 = vmatpush.msra.mxu0 0.0
  %96 = vmatpush.msra.mxu0 0.0
  %97 = vmatpush.msra.mxu0 0.0
  %98 = vmatpush.msra.mxu0 0.0
  %99 = vmatpush.msra.mxu0 0.0
  %100 = vmatpush.msra.mxu0 0.0
  %101 = vmatpush.msra.mxu0 0.0
  %102 = vmatpush.msra.mxu0 0.0
  %103 = vmatpush.msra.mxu0 0.0
  %104 = vmatpush.msra.mxu0 0.0
  %105 = vmatpush.msra.mxu0 0.0
  %106 = vmatpush.msra.mxu0 0.0
  %107 = vmatpush.msra.mxu0 0.0
  %108 = vmatpush.msra.mxu0 %v71
  %109 = vmatmul.f32.gmra.mxu0 %v66
  %v110 = vpop.f32.mrf.mxu0
  %v111 = vadd.f32 0.0, %v110
  %112 = vdwg.mxu0
  %v114 = vsel %vm64, %v57, 0
  %v117 = vsel %vm68, %v55, 0
  %v120 = vsel %vm68, %v56, 0
  %122 = vmatpush.msra.mxu0 0.0
  %123 = vmatpush.msra.mxu0 0.0
  %124 = vmatpush.msra.mxu0 0.0
  %125 = vmatpush.msra.mxu0 0.0
  %126 = vmatpush.msra.mxu0 0.0
  %127 = vmatpush.msra.mxu0 0.0
  %128 = vmatpush.msra.mxu0 0.0
  %129 = vmatpush.msra.mxu0 0.0
  %130 = vmatpush.msra.mxu0 0.0
  %131 = vmatpush.msra.mxu0 0.0
  %132 = vmatpush.msra.mxu0 0.0
  %133 = vmatpush.msra.mxu0 0.0
  %134 = vmatpush.msra.mxu0 0.0
  %135 = vmatpush.msra.mxu0 0.0
  %136 = vmatpush.msra.mxu0 0.0
  %137 = vmatpush.msra.mxu0 %v117
  %138 = vmatmul.f32.gmra.mxu0 %v114
  %v139 = vpop.f32.mrf.mxu0
  %v140 = vadd.f32 %v91, %v139
  %141 = vdwg.mxu0
  %142 = vmatpush.msra.mxu0 0.0
  %143 = vmatpush.msra.mxu0 0.0
  %144 = vmatpush.msra.mxu0 0.0
  %145 = vmatpush.msra.mxu0 0.0
  %146 = vmatpush.msra.mxu0 0.0
  %147 = vmatpush.msra.mxu0 0.0
  %148 = vmatpush.msra.mxu0 0.0
  %149 = vmatpush.msra.mxu0 0.0
  %150 = vmatpush.msra.mxu0 0.0
  %151 = vmatpush.msra.mxu0 0.0
  %152 = vmatpush.msra.mxu0 0.0
  %153 = vmatpush.msra.mxu0 0.0
  %154 = vmatpush.msra.mxu0 0.0
  %155 = vmatpush.msra.mxu0 0.0
  %156 = vmatpush.msra.mxu0 0.0
  %157 = vmatpush.msra.mxu0 %v120
  %158 = vmatmul.f32.gmra.mxu0 %v114
  %v159 = vpop.f32.mrf.mxu0
  %v160 = vadd.f32 %v111, %v159
  %161 = vdwg.mxu0
  %s162 = scalar_lea.vmem %s3, 8
  %v163 = vld [vmem:[%s162] sm:$0xf]
  %164 = vst [vmem:[#allocation1] ss:$2 sm:$0xff] %v35
  %v165 = vld.sshfl [vmem:[#allocation1] sm:$0xff pattern:$0x75316420]
  %v166 = vld.sshfl [vmem:[#allocation1 + $0x8] sm:$0xff pattern:$0x75316420]
  %v168 = vsel %vm64, %v163, 0
  %v170 = vsel %vm68, %v165, 0
  %v172 = vsel %vm68, %v166, 0
  %174 = vmatpush.msra.mxu0 0.0
  %175 = vmatpush.msra.mxu0 0.0
  %176 = vmatpush.msra.mxu0 0.0
  %177 = vmatpush.msra.mxu0 0.0
  %178 = vmatpush.msra.mxu0 0.0
  %179 = vmatpush.msra.mxu0 0.0
  %180 = vmatpush.msra.mxu0 0.0
  %181 = vmatpush.msra.mxu0 0.0
  %182 = vmatpush.msra.mxu0 0.0
  %183 = vmatpush.msra.mxu0 0.0
  %184 = vmatpush.msra.mxu0 0.0
  %185 = vmatpush.msra.mxu0 0.0
  %186 = vmatpush.msra.mxu0 0.0
  %187 = vmatpush.msra.mxu0 0.0
  %188 = vmatpush.msra.mxu0 0.0
  %189 = vmatpush.msra.mxu0 %v170
  %190 = vmatmul.f32.gmra.mxu0 %v168
  %v191 = vpop.f32.mrf.mxu0
  %v192 = vadd.f32 0.0, %v191
  %193 = vdwg.mxu0
  %194 = vmatpush.msra.mxu0 0.0
  %195 = vmatpush.msra.mxu0 0.0
  %196 = vmatpush.msra.mxu0 0.0
  %197 = vmatpush.msra.mxu0 0.0
  %198 = vmatpush.msra.mxu0 0.0
  %199 = vmatpush.msra.mxu0 0.0
  %200 = vmatpush.msra.mxu0 0.0
  %201 = vmatpush.msra.mxu0 0.0
  %202 = vmatpush.msra.mxu0 0.0
  %203 = vmatpush.msra.mxu0 0.0
  %204 = vmatpush.msra.mxu0 0.0
  %205 = vmatpush.msra.mxu0 0.0
  %206 = vmatpush.msra.mxu0 0.0
  %207 = vmatpush.msra.mxu0 0.0
  %208 = vmatpush.msra.mxu0 0.0
  %209 = vmatpush.msra.mxu0 %v172
  %210 = vmatmul.f32.gmra.mxu0 %v168
  %v211 = vpop.f32.mrf.mxu0
  %v212 = vadd.f32 0.0, %v211
  %213 = vdwg.mxu0
  %v214 = vadd.f32 %v140, %v192
  %v215 = vadd.f32 %v160, %v212
  %v216 = vld [vmem:[%s4] sm:$0xf]
  %218 = vset.pattern.permute.xlu0 0
  %219 = vperm.xlu0 %218, %v216
  %v220 = vpop.permute.xlu0 %219
  %v222 = vadd.f32 %v214, %v220
  %v223 = vadd.f32 %v215, %v220
  %v224 = vtanh.pop %v222
  %v225 = vtanh.pop %v223
  %v226 = vsel %vm33, 1, 0
  %v227 = vperm.slane %v226, 0
  %v228 = vperm.slane %v226, 1
  %vm229 = vcmp.eq.s32.totalorder %v227, 1
  %vm230 = vcmp.eq.s32.totalorder %v228, 1
  %v231 = vsel %vm229, %v224, 0.0
  %v232 = vsel %vm230, %v225, 0.0
  %235 = vrot.lane.b32.xlu0 %v231, 1
  %v236 = vpop.permute.xlu0 %235
  %237 = vrot.lane.b32.xlu0 %v232, 1
  %v238 = vpop.permute.xlu0 %237
  %v239 = vsel %vm44, %v236, %v238
  %v242 = vsel %vm44, 0.0, %v236
  %v243 = vsel %vm53, 0.0, %v242
  %v244 = vsel %vm54, 0.0, %v239
  %v245 = vld [vmem:[%s5] sm:$0xff]
  %s246 = scalar_lea.vmem %s5, 8
  %v247 = vld [vmem:[%s246] sm:$0xff]
  %v249 = vsel %vm64, %v247, 0
  %v251 = vsel %vm68, %v231, 0
  %v253 = vsel %vm68, %v232, 0
  %255 = vmatpush.msra.mxu0 0.0
  %256 = vmatpush.msra.mxu0 0.0
  %257 = vmatpush.msra.mxu0 0.0
  %258 = vmatpush.msra.mxu0 0.0
  %259 = vmatpush.msra.mxu0 0.0
  %260 = vmatpush.msra.mxu0 0.0
  %261 = vmatpush.msra.mxu0 0.0
  %262 = vmatpush.msra.mxu0 0.0
  %263 = vmatpush.msra.mxu0 0.0
  %264 = vmatpush.msra.mxu0 0.0
  %265 = vmatpush.msra.mxu0 0.0
  %266 = vmatpush.msra.mxu0 0.0
  %267 = vmatpush.msra.mxu0 0.0
  %268 = vmatpush.msra.mxu0 0.0
  %269 = vmatpush.msra.mxu0 0.0
  %270 = vmatpush.msra.mxu0 %v251
  %271 = vmatmul.f32.gmra.mxu0 %v249
  %v272 = vpop.f32.mrf.mxu0
  %v273 = vadd.f32 0.0, %v272
  %274 = vdwg.mxu0
  %275 = vmatpush.msra.mxu0 0.0
  %276 = vmatpush.msra.mxu0 0.0
  %277 = vmatpush.msra.mxu0 0.0
  %278 = vmatpush.msra.mxu0 0.0
  %279 = vmatpush.msra.mxu0 0.0
  %280 = vmatpush.msra.mxu0 0.0
  %281 = vmatpush.msra.mxu0 0.0
  %282 = vmatpush.msra.mxu0 0.0
  %283 = vmatpush.msra.mxu0 0.0
  %284 = vmatpush.msra.mxu0 0.0
  %285 = vmatpush.msra.mxu0 0.0
  %286 = vmatpush.msra.mxu0 0.0
  %287 = vmatpush.msra.mxu0 0.0
  %288 = vmatpush.msra.mxu0 0.0
  %289 = vmatpush.msra.mxu0 0.0
  %290 = vmatpush.msra.mxu0 %v253
  %291 = vmatmul.f32.gmra.mxu0 %v249
  %v292 = vpop.f32.mrf.mxu0
  %v293 = vadd.f32 0.0, %v292
  %294 = vdwg.mxu0
  %v296 = vsel %vm64, %v245, 0
  %v299 = vsel %vm68, %v243, 0
  %v302 = vsel %vm68, %v244, 0
  %304 = vmatpush.msra.mxu0 0.0
  %305 = vmatpush.msra.mxu0 0.0
  %306 = vmatpush.msra.mxu0 0.0
  %307 = vmatpush.msra.mxu0 0.0
  %308 = vmatpush.msra.mxu0 0.0
  %309 = vmatpush.msra.mxu0 0.0
  %310 = vmatpush.msra.mxu0 0.0
  %311 = vmatpush.msra.mxu0 0.0
  %312 = vmatpush.msra.mxu0 0.0
  %313 = vmatpush.msra.mxu0 0.0
  %314 = vmatpush.msra.mxu0 0.0
  %315 = vmatpush.msra.mxu0 0.0
  %316 = vmatpush.msra.mxu0 0.0
  %317 = vmatpush.msra.mxu0 0.0
  %318 = vmatpush.msra.mxu0 0.0
  %319 = vmatpush.msra.mxu0 %v299
  %320 = vmatmul.f32.gmra.mxu0 %v296
  %v321 = vpop.f32.mrf.mxu0
  %v322 = vadd.f32 %v273, %v321
  %323 = vdwg.mxu0
  %324 = vmatpush.msra.mxu0 0.0
  %325 = vmatpush.msra.mxu0 0.0
  %326 = vmatpush.msra.mxu0 0.0
  %327 = vmatpush.msra.mxu0 0.0
  %328 = vmatpush.msra.mxu0 0.0
  %329 = vmatpush.msra.mxu0 0.0
  %330 = vmatpush.msra.mxu0 0.0
  %331 = vmatpush.msra.mxu0 0.0
  %332 = vmatpush.msra.mxu0 0.0
  %333 = vmatpush.msra.mxu0 0.0
  %334 = vmatpush.msra.mxu0 0.0
  %335 = vmatpush.msra.mxu0 0.0
  %336 = vmatpush.msra.mxu0 0.0
  %337 = vmatpush.msra.mxu0 0.0
  %338 = vmatpush.msra.mxu0 0.0
  %339 = vmatpush.msra.mxu0 %v302
  %340 = vmatmul.f32.gmra.mxu0 %v296
  %v341 = vpop.f32.mrf.mxu0
  %v342 = vadd.f32 %v293, %v341
  %343 = vdwg.mxu0
  %344 = vrot.lane.b32.xlu0 %v231, 127
  %v345 = vpop.permute.xlu0 %344
  %346 = vrot.lane.b32.xlu0 %v232, 127
  %v347 = vpop.permute.xlu0 %346
  %vm348 = vcmask 1039360
  %v349 = vsel %vm348, %v345, %v347
  %v352 = vsel %vm348, %v347, 0.0
  %vm353 = vcmp.ge.s32.totalorder %v32, 127
  %v354 = vsel %vm353, 1, 0
  %v355 = vperm.slane %v354, 0
  %v356 = vperm.slane %v354, 1
  %vm357 = vcmp.eq.s32.totalorder %v355, 1
  %vm358 = vcmp.eq.s32.totalorder %v356, 1
  %v359 = vsel %vm357, 0.0, %v349
  %v360 = vsel %vm358, 0.0, %v352
  %s361 = scalar_lea.vmem %s5, 16
  %v362 = vld [vmem:[%s361] sm:$0xff]
  %v364 = vsel %vm64, %v362, 0
  %v367 = vsel %vm68, %v359, 0
  %v370 = vsel %vm68, %v360, 0
  %372 = vmatpush.msra.mxu0 0.0
  %373 = vmatpush.msra.mxu0 0.0
  %374 = vmatpush.msra.mxu0 0.0
  %375 = vmatpush.msra.mxu0 0.0
  %376 = vmatpush.msra.mxu0 0.0
  %377 = vmatpush.msra.mxu0 0.0
  %378 = vmatpush.msra.mxu0 0.0
  %379 = vmatpush.msra.mxu0 0.0
  %380 = vmatpush.msra.mxu0 0.0
  %381 = vmatpush.msra.mxu0 0.0
  %382 = vmatpush.msra.mxu0 0.0
  %383 = vmatpush.msra.mxu0 0.0
  %384 = vmatpush.msra.mxu0 0.0
  %385 = vmatpush.msra.mxu0 0.0
  %386 = vmatpush.msra.mxu0 0.0
  %387 = vmatpush.msra.mxu0 %v367
  %388 = vmatmul.f32.gmra.mxu0 %v364
  %v389 = vpop.f32.mrf.mxu0
  %v390 = vadd.f32 0.0, %v389
  %391 = vdwg.mxu0
  %392 = vmatpush.msra.mxu0 0.0
  %393 = vmatpush.msra.mxu0 0.0
  %394 = vmatpush.msra.mxu0 0.0
  %395 = vmatpush.msra.mxu0 0.0
  %396 = vmatpush.msra.mxu0 0.0
  %397 = vmatpush.msra.mxu0 0.0
  %398 = vmatpush.msra.mxu0 0.0
  %399 = vmatpush.msra.mxu0 0.0
  %400 = vmatpush.msra.mxu0 0.0
  %401 = vmatpush.msra.mxu0 0.0
  %402 = vmatpush.msra.mxu0 0.0
  %403 = vmatpush.msra.mxu0 0.0
  %404 = vmatpush.msra.mxu0 0.0
  %405 = vmatpush.msra.mxu0 0.0
  %406 = vmatpush.msra.mxu0 0.0
  %407 = vmatpush.msra.mxu0 %v370
  %408 = vmatmul.f32.gmra.mxu0 %v364
  %v409 = vpop.f32.mrf.mxu0
  %v410 = vadd.f32 0.0, %v409
  %411 = vdwg.mxu0
  %v412 = vadd.f32 %v322, %v390
  %v413 = vadd.f32 %v342, %v410
  %v414 = vld [vmem:[%s6] sm:$0xff]
  %416 = vset.pattern.permute.xlu0 0
  %417 = vperm.xlu0 %416, %v414
  %v418 = vpop.permute.xlu0 %417
  %v420 = vadd.f32 %v412, %v418
  %v421 = vadd.f32 %v413, %v418
  %v422 = vtanh.pop %v420
  %v423 = vtanh.pop %v421
  %v424 = vld [vmem:[%s7] sm:$0xff]
  %v425 = vld [vmem:[%s8] sm:$0xff]
  %427 = vset.pattern.permute.xlu0 0
  %428 = vperm.xlu0 %427, %v425
  %v429 = vpop.permute.xlu0 %428
  %431 = vst [vmem:[#allocation1] ss:$2 sm:$0xff] %v34
  %v432 = vld.sshfl [vmem:[#allocation1] sm:$0xff pattern:$0x75316420]
  %v433 = vld.sshfl [vmem:[#allocation1 + $0x8] sm:$0xff pattern:$0x75316420]
  %v435 = vsel %vm64, %v424, 0
  %v437 = vsel %vm68, %v432, 0
  %v439 = vsel %vm68, %v433, 0
  %441 = vmatpush.msra.mxu0 0.0
  %442 = vmatpush.msra.mxu0 0.0
  %443 = vmatpush.msra.mxu0 0.0
  %444 = vmatpush.msra.mxu0 0.0
  %445 = vmatpush.msra.mxu0 0.0
  %446 = vmatpush.msra.mxu0 0.0
  %447 = vmatpush.msra.mxu0 0.0
  %448 = vmatpush.msra.mxu0 0.0
  %449 = vmatpush.msra.mxu0 0.0
  %450 = vmatpush.msra.mxu0 0.0
  %451 = vmatpush.msra.mxu0 0.0
  %452 = vmatpush.msra.mxu0 0.0
  %453 = vmatpush.msra.mxu0 0.0
  %454 = vmatpush.msra.mxu0 0.0
  %455 = vmatpush.msra.mxu0 0.0
  %456 = vmatpush.msra.mxu0 %v437
  %457 = vmatmul.f32.gmra.mxu0 %v435
  %v458 = vpop.f32.mrf.mxu0
  %v459 = vadd.f32 %v429, %v458
  %460 = vdwg.mxu0
  %461 = vmatpush.msra.mxu0 0.0
  %462 = vmatpush.msra.mxu0 0.0
  %463 = vmatpush.msra.mxu0 0.0
  %464 = vmatpush.msra.mxu0 0.0
  %465 = vmatpush.msra.mxu0 0.0
  %466 = vmatpush.msra.mxu0 0.0
  %467 = vmatpush.msra.mxu0 0.0
  %468 = vmatpush.msra.mxu0 0.0
  %469 = vmatpush.msra.mxu0 0.0
  %470 = vmatpush.msra.mxu0 0.0
  %471 = vmatpush.msra.mxu0 0.0
  %472 = vmatpush.msra.mxu0 0.0
  %473 = vmatpush.msra.mxu0 0.0
  %474 = vmatpush.msra.mxu0 0.0
  %475 = vmatpush.msra.mxu0 0.0
  %476 = vmatpush.msra.mxu0 %v439
  %477 = vmatmul.f32.gmra.mxu0 %v435
  %v478 = vpop.f32.mrf.mxu0
  %v479 = vadd.f32 %v429, %v478
  %480 = vdwg.mxu0
  %481 = vst [vmem:[#allocation1] ss:$2 sm:$0xff] %v35
  %v482 = vld.sshfl [vmem:[#allocation1] sm:$0xff pattern:$0x75316420]
  %v483 = vld.sshfl [vmem:[#allocation1 + $0x8] sm:$0xff pattern:$0x75316420]
  %v484 = vsel %vm68, %v482, 0
  %v486 = vsel %vm68, %v483, 0
  %488 = vmatpush.msra.mxu0 0.0
  %489 = vmatpush.msra.mxu0 0.0
  %490 = vmatpush.msra.mxu0 0.0
  %491 = vmatpush.msra.mxu0 0.0
  %492 = vmatpush.msra.mxu0 0.0
  %493 = vmatpush.msra.mxu0 0.0
  %494 = vmatpush.msra.mxu0 0.0
  %495 = vmatpush.msra.mxu0 0.0
  %496 = vmatpush.msra.mxu0 0.0
  %497 = vmatpush.msra.mxu0 0.0
  %498 = vmatpush.msra.mxu0 0.0
  %499 = vmatpush.msra.mxu0 0.0
  %500 = vmatpush.msra.mxu0 0.0
  %501 = vmatpush.msra.mxu0 0.0
  %502 = vmatpush.msra.mxu0 0.0
  %503 = vmatpush.msra.mxu0 %v484
  %504 = vmatmul.f32.gmra.mxu0 %v435
  %v505 = vpop.f32.mrf.mxu0
  %v506 = vadd.f32 %v429, %v505
  %507 = vdwg.mxu0
  %508 = vmatpush.msra.mxu0 0.0
  %509 = vmatpush.msra.mxu0 0.0
  %510 = vmatpush.msra.mxu0 0.0
  %511 = vmatpush.msra.mxu0 0.0
  %512 = vmatpush.msra.mxu0 0.0
  %513 = vmatpush.msra.mxu0 0.0
  %514 = vmatpush.msra.mxu0 0.0
  %515 = vmatpush.msra.mxu0 0.0
  %516 = vmatpush.msra.mxu0 0.0
  %517 = vmatpush.msra.mxu0 0.0
  %518 = vmatpush.msra.mxu0 0.0
  %519 = vmatpush.msra.mxu0 0.0
  %520 = vmatpush.msra.mxu0 0.0
  %521 = vmatpush.msra.mxu0 0.0
  %522 = vmatpush.msra.mxu0 0.0
  %523 = vmatpush.msra.mxu0 %v486
  %524 = vmatmul.f32.gmra.mxu0 %v435
  %v525 = vpop.f32.mrf.mxu0
  %v526 = vadd.f32 %v429, %v525
  %527 = vdwg.mxu0
  %530 = vrot.lane.b32.xlu0 %v506, 1
  %v531 = vpop.permute.xlu0 %530
  %532 = vrot.lane.b32.xlu0 %v526, 1
  %v533 = vpop.permute.xlu0 %532
  %v534 = vsel %vm44, %v531, %v533
  %v537 = vsel %vm44, -1e+30, %v531
  %v538 = vsel %vm53, -1e+30, %v537
  %v539 = vsel %vm54, -1e+30, %v534
  %v540 = vmax.f32 %v538, %v459
  %v541 = vmax.f32 %v539, %v479
  %v542 = vmax.f32 %v540, %v506
  %v543 = vmax.f32 %v541, %v526
  %v544 = vadd.f32 %v422, %v542
  %v545 = vadd.f32 %v423, %v543
  %546 = vst [vmem:[%s9] sm:$0xff] %v544
  %547 = vst [vmem:[%s9 + $0x8] sm:$0xff] %v545
  // Predicated region
  $region38: #{_conv_layer_forward_impl.1} parent=0 // pred_check
    _
  $region39: #{_conv_layer_forward_impl.1} parent=0 // pred_check_branch
    %549 = sbr.rel (0) target = $region41
  $region40: #{_conv_layer_forward_impl.1} parent=0 // pred_region
    _
  $region41: #{_conv_layer_forward_impl.1} parent=0 // pred_fallthru
    _
  // Predicated region
  $region42: #{_conv_layer_forward_impl.1} parent=0 // pred_check
    _
  $region43: #{_conv_layer_forward_impl.1} parent=0 // pred_check_branch
    %551 = sbr.rel (0) target = $region45
  $region44: #{_conv_layer_forward_impl.1} parent=0 // pred_region
    _
  $region45: #{_conv_layer_forward_impl.1} parent=0 // pred_fallthru
    _

</llo_original>
